<compile_context>
chip_gen: v7x
topology: tpu7x:2x2x1
jax: 0.10.0
libtpu: 0.0.40
codegen_flags: <defaults>
</compile_context>

<pallas_src>
import jax
import jax.numpy as jnp
from jax.experimental import pallas as pl
from jax.experimental.pallas import tpu as pltpu

_LANE = 128
_SUBLANE = 8


def _round_up(x, m):
    return ((x + m - 1) // m) * m


def blob_mlp_kernel(x_ref, w1_ref, b1_ref, w2_ref, b2_ref, w3_ref, b3_ref, o_ref):
    # One batch tile in VMEM; three back-to-back MXU matmuls with f32 accumulation.
    # Weights are already (K, N) so no transpose / relayout inside the hot path.
    x = x_ref[...]
    h1 = jnp.dot(x, w1_ref[...], preferred_element_type=jnp.float32) + b1_ref[...]
    h2 = jnp.dot(h1, w2_ref[...], preferred_element_type=jnp.float32) + b2_ref[...]
    h3 = jnp.dot(h2, w3_ref[...], preferred_element_type=jnp.float32) + b3_ref[...]
    o_ref[...] = h3.astype(o_ref.dtype)


def _pad2(a, rows, cols):
    return jnp.pad(a, ((0, rows - a.shape[0]), (0, cols - a.shape[1])))


def blob_model_forward(x, params):
    """x: (B, in_features) f32. params: dict of w1,b1,w2,b2,w3,b3 in PyTorch shapes."""
    in_features = params["w1"].shape[1]
    hidden = params["w1"].shape[0]
    out_features = params["w3"].shape[0]
    B = x.shape[0]

    # Lane-pad the feature dims (zero pad => numerically identical after slicing).
    H_pad = _round_up(hidden, _LANE)
    N_pad = _round_up(out_features, _LANE)

    # Pre-transpose to (K, N) layout and pad. These ops are outside the kernel and
    # get fused/hoisted by XLA under jit.
    w1 = _pad2(params["w1"].T, in_features, H_pad)            # (K_in, H_pad)
    b1 = _pad2(params["b1"].reshape(1, -1), 1, H_pad)         # (1,   H_pad)
    w2 = _pad2(params["w2"].T, H_pad, H_pad)                  # (H_pad, H_pad)
    b2 = _pad2(params["b2"].reshape(1, -1), 1, H_pad)         # (1,   H_pad)
    w3 = _pad2(params["w3"].T, H_pad, N_pad)                  # (H_pad, N_pad)
    b3 = _pad2(params["b3"].reshape(1, -1), 1, N_pad)         # (1,   N_pad)

    # Batch tiling: big tiles (good HBM roofline) but sublane-aligned; pad B if needed.
    TILE_B = 512 if B >= 512 else _round_up(B, _SUBLANE)
    B_pad = _round_up(B, TILE_B)
    x_p = jnp.pad(x, ((0, B_pad - B), (0, 0)))
    grid = (B_pad // TILE_B,)

    resident = lambda a: pl.BlockSpec(a.shape, lambda i: (0, 0))  # weights/biases stay in VMEM

    out = pl.pallas_call(
        blob_mlp_kernel,
        out_shape=jax.ShapeDtypeStruct((B_pad, N_pad), jnp.float32),
        grid=grid,
        in_specs=[
            pl.BlockSpec((TILE_B, in_features), lambda i: (i, 0)),  # x tile (pipelined)
            resident(w1), resident(b1),
            resident(w2), resident(b2),
            resident(w3), resident(b3),
        ],
        out_specs=pl.BlockSpec((TILE_B, N_pad), lambda i: (i, 0)),
        compiler_params=pltpu.CompilerParams(dimension_semantics=("parallel",)),
    )(x_p, w1, b1, w2, b2, w3, b3)

    return out[:B, :out_features]


def init_params(key, input_features, output_features, hidden_units=8):
    """Deterministic init mimicking nn.Linear (uniform in +/- 1/sqrt(fan_in))."""
    ks = jax.random.split(key, 6)

    def linear_init(kw, kb, fan_in, fan_out):
        bound = 1.0 / (fan_in ** 0.5)
        w = jax.random.uniform(kw, (fan_out, fan_in), jnp.float32, -bound, bound)
        b = jax.random.uniform(kb, (fan_out,), jnp.float32, -bound, bound)
        return w, b

    w1, b1 = linear_init(ks[0], ks[1], input_features, hidden_units)
    w2, b2 = linear_init(ks[2], ks[3], hidden_units, hidden_units)
    w3, b3 = linear_init(ks[4], ks[5], hidden_units, output_features)
    return {"w1": w1, "b1": b1, "w2": w2, "b2": b2, "w3": w3, "b3": b3}


if __name__ == "__main__":
    key = jax.random.PRNGKey(0)
    k_x, k_p = jax.random.split(key)

    input_features, output_features, hidden_units = 4, 3, 8
    batch = 8

    x = jax.random.normal(k_x, (batch, input_features), jnp.float32)
    params = init_params(k_p, input_features, output_features, hidden_units)

    fwd = jax.jit(blob_model_forward)
    out = jax.block_until_ready(fwd(x, params))

    # Reference check in plain JAX (same math: 3 chained Linear layers).
    ref = x
    for wn, bn in (("w1", "b1"), ("w2", "b2"), ("w3", "b3")):
        ref = ref @ params[wn].T + params[bn]
    assert out.shape == (batch, output_features)
    assert jnp.allclose(out, ref, atol=1e-5, rtol=1e-5)

    print("KERNEL_OK")
</pallas_src>

<mosaic_0001>
module attributes {stable_mosaic.version = 11 : i64} {
  func.func @blob_mlp_kernel(%arg0: i32, %arg1: memref<8x4xf32, #tpu.memory_space<vmem>>, %arg2: memref<4x128xf32, #tpu.memory_space<vmem>>, %arg3: memref<1x128xf32, #tpu.memory_space<vmem>>, %arg4: memref<128x128xf32, #tpu.memory_space<vmem>>, %arg5: memref<1x128xf32, #tpu.memory_space<vmem>>, %arg6: memref<128x128xf32, #tpu.memory_space<vmem>>, %arg7: memref<1x128xf32, #tpu.memory_space<vmem>>, %arg8: memref<8x128xf32, #tpu.memory_space<vmem>>) attributes {dimension_semantics = [#tpu.dimension_semantics<parallel>], iteration_bounds = array<i64: 1>, scalar_prefetch = 0 : i64, scratch_operands = 0 : i64, tpu.core_type = #tpu.core_type<tc>, window_params = [{transform_indices = @transform_0, window_bounds = array<i64: 8, 4>}, {pipeline_mode = #tpu.pipeline_mode<synchronous>, transform_indices = @transform_1, window_bounds = array<i64: 4, 128>}, {pipeline_mode = #tpu.pipeline_mode<synchronous>, transform_indices = @transform_2, window_bounds = array<i64: 1, 128>}, {pipeline_mode = #tpu.pipeline_mode<synchronous>, transform_indices = @transform_3, window_bounds = array<i64: 128, 128>}, {pipeline_mode = #tpu.pipeline_mode<synchronous>, transform_indices = @transform_4, window_bounds = array<i64: 1, 128>}, {pipeline_mode = #tpu.pipeline_mode<synchronous>, transform_indices = @transform_5, window_bounds = array<i64: 128, 128>}, {pipeline_mode = #tpu.pipeline_mode<synchronous>, transform_indices = @transform_6, window_bounds = array<i64: 1, 128>}, {transform_indices = @transform_7, window_bounds = array<i64: 8, 128>}]} {
    %c0 = arith.constant 0 : index
    %c0_0 = arith.constant 0 : index
    %0 = vector.load %arg1[%c0, %c0_0] : memref<8x4xf32, #tpu.memory_space<vmem>>, vector<8x4xf32>
    %c0_1 = arith.constant 0 : index
    %c0_2 = arith.constant 0 : index
    %1 = vector.load %arg2[%c0_1, %c0_2] : memref<4x128xf32, #tpu.memory_space<vmem>>, vector<4x128xf32>
    %cst = arith.constant dense<0.000000e+00> : vector<8x128xf32>
    %2 = tpu.matmul %0, %1, %cst {dimension_numbers = #tpu.dot_dimension_numbers<[1], [0], [0], [1], [0, 0, 1, 1], [], []>} : vector<8x4xf32>, vector<4x128xf32>, vector<8x128xf32> -> vector<8x128xf32>
    %c0_3 = arith.constant 0 : index
    %c0_4 = arith.constant 0 : index
    %3 = vector.load %arg3[%c0_3, %c0_4] : memref<1x128xf32, #tpu.memory_space<vmem>>, vector<1x128xf32>
    %4 = vector.broadcast %3 : vector<1x128xf32> to vector<8x128xf32>
    %5 = arith.addf %2, %4 : vector<8x128xf32>
    %c0_5 = arith.constant 0 : index
    %c0_6 = arith.constant 0 : index
    %6 = vector.load %arg4[%c0_5, %c0_6] : memref<128x128xf32, #tpu.memory_space<vmem>>, vector<128x128xf32>
    %cst_7 = arith.constant dense<0.000000e+00> : vector<8x128xf32>
    %7 = tpu.matmul %5, %6, %cst_7 {dimension_numbers = #tpu.dot_dimension_numbers<[1], [0], [0], [1], [0, 0, 1, 1], [], []>} : vector<8x128xf32>, vector<128x128xf32>, vector<8x128xf32> -> vector<8x128xf32>
    %c0_8 = arith.constant 0 : index
    %c0_9 = arith.constant 0 : index
    %8 = vector.load %arg5[%c0_8, %c0_9] : memref<1x128xf32, #tpu.memory_space<vmem>>, vector<1x128xf32>
    %9 = vector.broadcast %8 : vector<1x128xf32> to vector<8x128xf32>
    %10 = arith.addf %7, %9 : vector<8x128xf32>
    %c0_10 = arith.constant 0 : index
    %c0_11 = arith.constant 0 : index
    %11 = vector.load %arg6[%c0_10, %c0_11] : memref<128x128xf32, #tpu.memory_space<vmem>>, vector<128x128xf32>
    %cst_12 = arith.constant dense<0.000000e+00> : vector<8x128xf32>
    %12 = tpu.matmul %10, %11, %cst_12 {dimension_numbers = #tpu.dot_dimension_numbers<[1], [0], [0], [1], [0, 0, 1, 1], [], []>} : vector<8x128xf32>, vector<128x128xf32>, vector<8x128xf32> -> vector<8x128xf32>
    %c0_13 = arith.constant 0 : index
    %c0_14 = arith.constant 0 : index
    %13 = vector.load %arg7[%c0_13, %c0_14] : memref<1x128xf32, #tpu.memory_space<vmem>>, vector<1x128xf32>
    %14 = vector.broadcast %13 : vector<1x128xf32> to vector<8x128xf32>
    %15 = arith.addf %12, %14 : vector<8x128xf32>
    %c0_15 = arith.constant 0 : index
    %c0_16 = arith.constant 0 : index
    %16 = vector.load %arg8[%c0_15, %c0_16] : memref<8x128xf32, #tpu.memory_space<vmem>>, vector<8x128xf32>
    tpu.vector_store %arg8[%c0_15, %c0_16], %15 {strides = array<i32>} : memref<8x128xf32, #tpu.memory_space<vmem>>, vector<8x128xf32>,
    return
  }
  func.func @transform_0(%arg0: i32) -> (i32, i32) {
    %c0_i32 = arith.constant 0 : i32
    %c0_i32_0 = arith.constant 0 : i32
    return %arg0, %c0_i32 : i32, i32
  }
  func.func @transform_1(%arg0: i32) -> (i32, i32) {
    %c0_i32 = arith.constant 0 : i32
    %c0_i32_0 = arith.constant 0 : i32
    %c0_i32_1 = arith.constant 0 : i32
    return %c0_i32, %c0_i32_0 : i32, i32
  }
  func.func @transform_2(%arg0: i32) -> (i32, i32) {
    %c0_i32 = arith.constant 0 : i32
    %c0_i32_0 = arith.constant 0 : i32
    %c0_i32_1 = arith.constant 0 : i32
    return %c0_i32, %c0_i32_0 : i32, i32
  }
  func.func @transform_3(%arg0: i32) -> (i32, i32) {
    %c0_i32 = arith.constant 0 : i32
    %c0_i32_0 = arith.constant 0 : i32
    %c0_i32_1 = arith.constant 0 : i32
    return %c0_i32, %c0_i32_0 : i32, i32
  }
  func.func @transform_4(%arg0: i32) -> (i32, i32) {
    %c0_i32 = arith.constant 0 : i32
    %c0_i32_0 = arith.constant 0 : i32
    %c0_i32_1 = arith.constant 0 : i32
    return %c0_i32, %c0_i32_0 : i32, i32
  }
  func.func @transform_5(%arg0: i32) -> (i32, i32) {
    %c0_i32 = arith.constant 0 : i32
    %c0_i32_0 = arith.constant 0 : i32
    %c0_i32_1 = arith.constant 0 : i32
    return %c0_i32, %c0_i32_0 : i32, i32
  }
  func.func @transform_6(%arg0: i32) -> (i32, i32) {
    %c0_i32 = arith.constant 0 : i32
    %c0_i32_0 = arith.constant 0 : i32
    %c0_i32_1 = arith.constant 0 : i32
    return %c0_i32, %c0_i32_0 : i32, i32
  }
  func.func @transform_7(%arg0: i32) -> (i32, i32) {
    %c0_i32 = arith.constant 0 : i32
    %c0_i32_0 = arith.constant 0 : i32
    return %arg0, %c0_i32 : i32, i32
  }
}

</mosaic_0001>

<llo_original>
// kernel: blob_model_forward.1
$region0: #{blob_model_forward.1}
  #allocation0 [shape = 'u32[]', space=smem, size = 0x4, offset = 0x4, fixed_abs, tag = 'smem constant byte address 0x4 - core index']
  #allocation1 [shape = 'u32[144,128]{1,0:T(1,128)}', space=vmem, size = 0x12000, scoped, tag = 'internal scratch']
  %s0 = inlined_call_operand.vmem [shape: f32[8,4], index: 0, kind: input, shape index: {}]
  %s1 = inlined_call_operand.vmem [shape: f32[4,128], index: 1, kind: input, shape index: {}]
  %s2 = inlined_call_operand.vmem [shape: f32[1,128], index: 2, kind: input, shape index: {}]
  %s3 = inlined_call_operand.vmem [shape: f32[128,128], index: 3, kind: input, shape index: {}]
  %s4 = inlined_call_operand.vmem [shape: f32[1,128], index: 4, kind: input, shape index: {}]
  %s5 = inlined_call_operand.vmem [shape: f32[128,128], index: 5, kind: input, shape index: {}]
  %s6 = inlined_call_operand.vmem [shape: f32[1,128], index: 6, kind: input, shape index: {}]
  %s7 = inlined_call_operand.vmem [shape: f32[8,128], index: 7, kind: output, shape index: {}]
  %s8 = sld [smem:[#allocation0]]
  $region38: #{blob_model_forward.1} parent=0
    _
  %s10 = ssub.s32 1, %s8
  %s11 = scalar_select 0, %s10, %s8
  // Predicated region
  $region2: #{blob_model_forward.1} parent=0 // pred_check
    _
  $region3: #{blob_model_forward.1} parent=0 // pred_check_branch
    %13 = sbr.rel (0) target = $region5
  $region4: #{blob_model_forward.1} parent=0 // pred_region
    _
  $region5: #{blob_model_forward.1} parent=0 // pred_fallthru
    _
  // Predicated region
  $region6: #{blob_model_forward.1} parent=0 // pred_check
    _
  $region7: #{blob_model_forward.1} parent=0 // pred_check_branch
    %15 = sbr.rel (0) target = $region9
  $region8: #{blob_model_forward.1} parent=0 // pred_region
    _
  $region9: #{blob_model_forward.1} parent=0 // pred_fallthru
    _
  // Predicated region
  $region10: #{blob_model_forward.1} parent=0 // pred_check
    _
  $region11: #{blob_model_forward.1} parent=0 // pred_check_branch
    %17 = sbr.rel (0) target = $region13
  $region12: #{blob_model_forward.1} parent=0 // pred_region
    _
  $region13: #{blob_model_forward.1} parent=0 // pred_fallthru
    _
  // Predicated region
  $region14: #{blob_model_forward.1} parent=0 // pred_check
    _
  $region15: #{blob_model_forward.1} parent=0 // pred_check_branch
    %19 = sbr.rel (0) target = $region17
  $region16: #{blob_model_forward.1} parent=0 // pred_region
    _
  $region17: #{blob_model_forward.1} parent=0 // pred_fallthru
    _
  // Predicated region
  $region18: #{blob_model_forward.1} parent=0 // pred_check
    _
  $region19: #{blob_model_forward.1} parent=0 // pred_check_branch
    %21 = sbr.rel (0) target = $region21
  $region20: #{blob_model_forward.1} parent=0 // pred_region
    _
  $region21: #{blob_model_forward.1} parent=0 // pred_fallthru
    _
  // Predicated region
  $region22: #{blob_model_forward.1} parent=0 // pred_check
    _
  $region23: #{blob_model_forward.1} parent=0 // pred_check_branch
    %23 = sbr.rel (0) target = $region25
  $region24: #{blob_model_forward.1} parent=0 // pred_region
    _
  $region25: #{blob_model_forward.1} parent=0 // pred_fallthru
    _
  // Predicated region
  $region26: #{blob_model_forward.1} parent=0 // pred_check
    _
  $region27: #{blob_model_forward.1} parent=0 // pred_check_branch
    %25 = sbr.rel (0) target = $region29
  $region28: #{blob_model_forward.1} parent=0 // pred_region
    _
  $region29: #{blob_model_forward.1} parent=0 // pred_fallthru
    _
  %v26 = vld [vmem:[%s0] sm:$0xff]
  %v27 = vld [vmem:[%s1] sm:$0xf]
  %v28 = vld [vmem:[%s2] sm:$0x1]
  %v30 = vlaneseq
  %v31 = vshrl.u32 %v30, 7
  %v32 = vsub.s32 0, %v31
  %v33 = vrot.slane %v28, %v32
  %vm35 = vcmask 31744
  %v37 = vsel %vm35, %v26, 0
  %vm39 = vcmask 1043456
  %v41 = vsel %vm39, %v27, 0
  %43 = vmatprep.subr.mxu0 0.0
  %44 = vmatpush1.msra.mxu0 %v41
  %45 = vmatprep.subr.mxu0 0.0
  %46 = vmatpush1.msra.mxu0 0.0
  %47 = vmatprep.subr.mxu0 0.0
  %48 = vmatpush1.msra.mxu0 0.0
  %49 = vmatprep.subr.mxu0 0.0
  %50 = vmatpush1.msra.mxu0 0.0
  %51 = vmatprep.subr.mxu0 0.0
  %52 = vmatpush1.msra.mxu0 0.0
  %53 = vmatprep.subr.mxu0 0.0
  %54 = vmatpush1.msra.mxu0 0.0
  %55 = vmatprep.subr.mxu0 0.0
  %56 = vmatpush1.msra.mxu0 0.0
  %57 = vmatprep.subr.mxu0 0.0
  %58 = vmatpush1.msra.mxu0 0.0
  %59 = vmatprep.subr.mxu0 0.0
  %60 = vmatpush1.msra.mxu0 0.0
  %61 = vmatprep.subr.mxu0 0.0
  %62 = vmatpush1.msra.mxu0 0.0
  %63 = vmatprep.subr.mxu0 0.0
  %64 = vmatpush1.msra.mxu0 0.0
  %65 = vmatprep.subr.mxu0 0.0
  %66 = vmatpush1.msra.mxu0 0.0
  %67 = vmatprep.subr.mxu0 0.0
  %68 = vmatpush1.msra.mxu0 0.0
  %69 = vmatprep.subr.mxu0 0.0
  %70 = vmatpush1.msra.mxu0 0.0
  %71 = vmatprep.subr.mxu0 0.0
  %72 = vmatpush1.msra.mxu0 0.0
  %73 = vmatprep.subr.mxu0 0.0
  %74 = vmatpush1.msra.mxu0 0.0
  %75 = vmatprep.subr.mxu0 0.0
  %76 = vmatpush1.msra.mxu0 0.0
  %77 = vmatprep.subr.mxu0 0.0
  %78 = vmatpush1.msra.mxu0 0.0
  %79 = vmatprep.subr.mxu0 0.0
  %80 = vmatpush1.msra.mxu0 0.0
  %81 = vmatprep.subr.mxu0 0.0
  %82 = vmatpush1.msra.mxu0 0.0
  %83 = vmatprep.subr.mxu0 0.0
  %84 = vmatpush1.msra.mxu0 0.0
  %85 = vmatprep.subr.mxu0 0.0
  %86 = vmatpush1.msra.mxu0 0.0
  %87 = vmatprep.subr.mxu0 0.0
  %88 = vmatpush1.msra.mxu0 0.0
  %89 = vmatprep.subr.mxu0 0.0
  %90 = vmatpush1.msra.mxu0 0.0
  %91 = vmatprep.subr.mxu0 0.0
  %92 = vmatpush1.msra.mxu0 0.0
  %93 = vmatprep.subr.mxu0 0.0
  %94 = vmatpush1.msra.mxu0 0.0
  %95 = vmatprep.subr.mxu0 0.0
  %96 = vmatpush1.msra.mxu0 0.0
  %97 = vmatprep.subr.mxu0 0.0
  %98 = vmatpush1.msra.mxu0 0.0
  %99 = vmatprep.subr.mxu0 0.0
  %100 = vmatpush1.msra.mxu0 0.0
  %101 = vmatprep.subr.mxu0 0.0
  %102 = vmatpush1.msra.mxu0 0.0
  %103 = vmatprep.subr.mxu0 0.0
  %104 = vmatpush1.msra.mxu0 0.0
  %105 = vmatprep.subr.mxu0 0.0
  %106 = vmatpush1.msra.mxu0 0.0
  %107 = vmatprep.mubr.f32.mxu0 0.0
  %108 = vmatmul.mubr.f32.gmra.mrb[0].mxu0 %v37
  %v109 = vpop.f32.mrb[0].mxu0
  %v110 = vadd.f32 %v33, %v109
  %v111 = vpop.f32.mrb[0].mxu0
  %112 = vdwg.mxu0
  %v113 = vld [vmem:[%s3] sm:$0xff]
  %v114 = vld [vmem:[%s3 + $0x8] sm:$0xff]
  %v115 = vld [vmem:[%s3 + $0x10] sm:$0xff]
  %v116 = vld [vmem:[%s3 + $0x18] sm:$0xff]
  %v117 = vld [vmem:[%s3 + $0x20] sm:$0xff]
  %v118 = vld [vmem:[%s3 + $0x28] sm:$0xff]
  %v119 = vld [vmem:[%s3 + $0x30] sm:$0xff]
  %v120 = vld [vmem:[%s3 + $0x38] sm:$0xff]
  %v121 = vld [vmem:[%s3 + $0x40] sm:$0xff]
  %v122 = vld [vmem:[%s3 + $0x48] sm:$0xff]
  %v123 = vld [vmem:[%s3 + $0x50] sm:$0xff]
  %v124 = vld [vmem:[%s3 + $0x58] sm:$0xff]
  %v125 = vld [vmem:[%s3 + $0x60] sm:$0xff]
  %v126 = vld [vmem:[%s3 + $0x68] sm:$0xff]
  %v127 = vld [vmem:[%s3 + $0x70] sm:$0xff]
  %v128 = vld [vmem:[%s3 + $0x78] sm:$0xff]
  %v129 = vld [vmem:[%s4] sm:$0x1]
  %v131 = vlaneseq
  %v132 = vshrl.u32 %v131, 7
  %v133 = vsub.s32 0, %v132
  %v134 = vrot.slane %v129, %v133
  %136 = vmatprep.subr.mxu0 0.0
  %137 = vmatpush1.msra.mxu0 %v113
  %138 = vmatprep.subr.mxu0 0.0
  %139 = vmatpush1.msra.mxu0 %v114
  %140 = vmatprep.subr.mxu0 0.0
  %141 = vmatpush1.msra.mxu0 %v115
  %142 = vmatprep.subr.mxu0 0.0
  %143 = vmatpush1.msra.mxu0 %v116
  %144 = vmatprep.subr.mxu0 0.0
  %145 = vmatpush1.msra.mxu0 %v117
  %146 = vmatprep.subr.mxu0 0.0
  %147 = vmatpush1.msra.mxu0 %v118
  %148 = vmatprep.subr.mxu0 0.0
  %149 = vmatpush1.msra.mxu0 %v119
  %150 = vmatprep.subr.mxu0 0.0
  %151 = vmatpush1.msra.mxu0 %v120
  %152 = vmatprep.subr.mxu0 0.0
  %153 = vmatpush1.msra.mxu0 %v121
  %154 = vmatprep.subr.mxu0 0.0
  %155 = vmatpush1.msra.mxu0 %v122
  %156 = vmatprep.subr.mxu0 0.0
  %157 = vmatpush1.msra.mxu0 %v123
  %158 = vmatprep.subr.mxu0 0.0
  %159 = vmatpush1.msra.mxu0 %v124
  %160 = vmatprep.subr.mxu0 0.0
  %161 = vmatpush1.msra.mxu0 %v125
  %162 = vmatprep.subr.mxu0 0.0
  %163 = vmatpush1.msra.mxu0 %v126
  %164 = vmatprep.subr.mxu0 0.0
  %165 = vmatpush1.msra.mxu0 %v127
  %166 = vmatprep.subr.mxu0 0.0
  %167 = vmatpush1.msra.mxu0 %v128
  %168 = vmatprep.subr.mxu0 0.0
  %169 = vmatpush1.msra.mxu0 0.0
  %170 = vmatprep.subr.mxu0 0.0
  %171 = vmatpush1.msra.mxu0 0.0
  %172 = vmatprep.subr.mxu0 0.0
  %173 = vmatpush1.msra.mxu0 0.0
  %174 = vmatprep.subr.mxu0 0.0
  %175 = vmatpush1.msra.mxu0 0.0
  %176 = vmatprep.subr.mxu0 0.0
  %177 = vmatpush1.msra.mxu0 0.0
  %178 = vmatprep.subr.mxu0 0.0
  %179 = vmatpush1.msra.mxu0 0.0
  %180 = vmatprep.subr.mxu0 0.0
  %181 = vmatpush1.msra.mxu0 0.0
  %182 = vmatprep.subr.mxu0 0.0
  %183 = vmatpush1.msra.mxu0 0.0
  %184 = vmatprep.subr.mxu0 0.0
  %185 = vmatpush1.msra.mxu0 0.0
  %186 = vmatprep.subr.mxu0 0.0
  %187 = vmatpush1.msra.mxu0 0.0
  %188 = vmatprep.subr.mxu0 0.0
  %189 = vmatpush1.msra.mxu0 0.0
  %190 = vmatprep.subr.mxu0 0.0
  %191 = vmatpush1.msra.mxu0 0.0
  %192 = vmatprep.subr.mxu0 0.0
  %193 = vmatpush1.msra.mxu0 0.0
  %194 = vmatprep.subr.mxu0 0.0
  %195 = vmatpush1.msra.mxu0 0.0
  %196 = vmatprep.subr.mxu0 0.0
  %197 = vmatpush1.msra.mxu0 0.0
  %198 = vmatprep.subr.mxu0 0.0
  %199 = vmatpush1.msra.mxu0 0.0
  %200 = vmatprep.mubr.f32.mxu0 0.0
  %201 = vmatmul.mubr.f32.gmra.mrb[0].mxu0 %v110
  %v202 = vpop.f32.mrb[0].mxu0
  %v203 = vadd.f32 %v134, %v202
  %v204 = vpop.f32.mrb[0].mxu0
  %205 = vdwg.mxu0
  %v206 = vld [vmem:[%s5] sm:$0xff]
  %v207 = vld [vmem:[%s5 + $0x8] sm:$0xff]
  %v208 = vld [vmem:[%s5 + $0x10] sm:$0xff]
  %v209 = vld [vmem:[%s5 + $0x18] sm:$0xff]
  %v210 = vld [vmem:[%s5 + $0x20] sm:$0xff]
  %v211 = vld [vmem:[%s5 + $0x28] sm:$0xff]
  %v212 = vld [vmem:[%s5 + $0x30] sm:$0xff]
  %v213 = vld [vmem:[%s5 + $0x38] sm:$0xff]
  %v214 = vld [vmem:[%s5 + $0x40] sm:$0xff]
  %v215 = vld [vmem:[%s5 + $0x48] sm:$0xff]
  %v216 = vld [vmem:[%s5 + $0x50] sm:$0xff]
  %v217 = vld [vmem:[%s5 + $0x58] sm:$0xff]
  %v218 = vld [vmem:[%s5 + $0x60] sm:$0xff]
  %v219 = vld [vmem:[%s5 + $0x68] sm:$0xff]
  %v220 = vld [vmem:[%s5 + $0x70] sm:$0xff]
  %v221 = vld [vmem:[%s5 + $0x78] sm:$0xff]
  %v222 = vld [vmem:[%s6] sm:$0x1]
  %v224 = vlaneseq
  %v225 = vshrl.u32 %v224, 7
  %v226 = vsub.s32 0, %v225
  %v227 = vrot.slane %v222, %v226
  %229 = vmatprep.subr.mxu0 0.0
  %230 = vmatpush1.msra.mxu0 %v206
  %231 = vmatprep.subr.mxu0 0.0
  %232 = vmatpush1.msra.mxu0 %v207
  %233 = vmatprep.subr.mxu0 0.0
  %234 = vmatpush1.msra.mxu0 %v208
  %235 = vmatprep.subr.mxu0 0.0
  %236 = vmatpush1.msra.mxu0 %v209
  %237 = vmatprep.subr.mxu0 0.0
  %238 = vmatpush1.msra.mxu0 %v210
  %239 = vmatprep.subr.mxu0 0.0
  %240 = vmatpush1.msra.mxu0 %v211
  %241 = vmatprep.subr.mxu0 0.0
  %242 = vmatpush1.msra.mxu0 %v212
  %243 = vmatprep.subr.mxu0 0.0
  %244 = vmatpush1.msra.mxu0 %v213
  %245 = vmatprep.subr.mxu0 0.0
  %246 = vmatpush1.msra.mxu0 %v214
  %247 = vmatprep.subr.mxu0 0.0
  %248 = vmatpush1.msra.mxu0 %v215
  %249 = vmatprep.subr.mxu0 0.0
  %250 = vmatpush1.msra.mxu0 %v216
  %251 = vmatprep.subr.mxu0 0.0
  %252 = vmatpush1.msra.mxu0 %v217
  %253 = vmatprep.subr.mxu0 0.0
  %254 = vmatpush1.msra.mxu0 %v218
  %255 = vmatprep.subr.mxu0 0.0
  %256 = vmatpush1.msra.mxu0 %v219
  %257 = vmatprep.subr.mxu0 0.0
  %258 = vmatpush1.msra.mxu0 %v220
  %259 = vmatprep.subr.mxu0 0.0
  %260 = vmatpush1.msra.mxu0 %v221
  %261 = vmatprep.subr.mxu0 0.0
  %262 = vmatpush1.msra.mxu0 0.0
  %263 = vmatprep.subr.mxu0 0.0
  %264 = vmatpush1.msra.mxu0 0.0
  %265 = vmatprep.subr.mxu0 0.0
  %266 = vmatpush1.msra.mxu0 0.0
  %267 = vmatprep.subr.mxu0 0.0
  %268 = vmatpush1.msra.mxu0 0.0
  %269 = vmatprep.subr.mxu0 0.0
  %270 = vmatpush1.msra.mxu0 0.0
  %271 = vmatprep.subr.mxu0 0.0
  %272 = vmatpush1.msra.mxu0 0.0
  %273 = vmatprep.subr.mxu0 0.0
  %274 = vmatpush1.msra.mxu0 0.0
  %275 = vmatprep.subr.mxu0 0.0
  %276 = vmatpush1.msra.mxu0 0.0
  %277 = vmatprep.subr.mxu0 0.0
  %278 = vmatpush1.msra.mxu0 0.0
  %279 = vmatprep.subr.mxu0 0.0
  %280 = vmatpush1.msra.mxu0 0.0
  %281 = vmatprep.subr.mxu0 0.0
  %282 = vmatpush1.msra.mxu0 0.0
  %283 = vmatprep.subr.mxu0 0.0
  %284 = vmatpush1.msra.mxu0 0.0
  %285 = vmatprep.subr.mxu0 0.0
  %286 = vmatpush1.msra.mxu0 0.0
  %287 = vmatprep.subr.mxu0 0.0
  %288 = vmatpush1.msra.mxu0 0.0
  %289 = vmatprep.subr.mxu0 0.0
  %290 = vmatpush1.msra.mxu0 0.0
  %291 = vmatprep.subr.mxu0 0.0
  %292 = vmatpush1.msra.mxu0 0.0
  %293 = vmatprep.mubr.f32.mxu0 0.0
  %294 = vmatmul.mubr.f32.gmra.mrb[0].mxu0 %v203
  %v295 = vpop.f32.mrb[0].mxu0
  %v296 = vadd.f32 %v227, %v295
  %v297 = vpop.f32.mrb[0].mxu0
  %298 = vdwg.mxu0
  %299 = vst [vmem:[%s7] sm:$0xff] %v296
  // Predicated region
  $region30: #{blob_model_forward.1} parent=0 // pred_check
    _
  $region31: #{blob_model_forward.1} parent=0 // pred_check_branch
    %301 = sbr.rel (0) target = $region33
  $region32: #{blob_model_forward.1} parent=0 // pred_region
    _
  $region33: #{blob_model_forward.1} parent=0 // pred_fallthru
    _
  // Predicated region
  $region34: #{blob_model_forward.1} parent=0 // pred_check
    _
  $region35: #{blob_model_forward.1} parent=0 // pred_check_branch
    %303 = sbr.rel (0) target = $region37
  $region36: #{blob_model_forward.1} parent=0 // pred_region
    _
  $region37: #{blob_model_forward.1} parent=0 // pred_fallthru
    _

</llo_original>
